<compile_context>
chip_gen: v7x
topology: tpu7x:2x2x1
jax: 0.10.0
libtpu: 0.0.40
codegen_flags: <defaults>
</compile_context>

<pallas_src>
import jax
import jax.numpy as jnp
from jax import lax
from jax.experimental import pallas as pl
from jax.experimental.pallas import tpu as pltpu

block_size = 64      # max sequence length (tril buffer size in the torch code)
n_embd = 384
dropout = 0.2        # eval-mode identity; see TODO in the kernel


def _head_kernel(x_ref, wqkv_ref, o_ref):
    # x_ref:    (Bb, T, C)  bf16   batch block
    # wqkv_ref: (C, 3H)     bf16   columns ordered [q*scale | k | v]
    # o_ref:    (Bb, T, H)
    Bb, T, C = x_ref.shape
    H = o_ref.shape[-1]

    x = x_ref[...]
    w = wqkv_ref[...]

    # One fused QKV projection: M = Bb*T rows, N = 3H lanes on the MXU.
    qkv = jnp.dot(x.reshape(Bb * T, C), w,
                  preferred_element_type=jnp.float32)          # (Bb*T, 3H) f32
    qkv = qkv.reshape(Bb, T, 3 * H)
    q = qkv[:, :, 0 * H:1 * H].astype(jnp.bfloat16)  # scale already folded in
    k = qkv[:, :, 1 * H:2 * H].astype(jnp.bfloat16)
    v = qkv[:, :, 2 * H:3 * H].astype(jnp.bfloat16)

    # Attention scores: contract last dims of q and k directly (no transpose).
    s = jnp.einsum("bqd,bkd->bqk", q, k,
                   preferred_element_type=jnp.float32)         # (Bb, T, T) f32

    # Causal (tril) mask: position (i, j) allowed iff j <= i.
    row = lax.broadcasted_iota(jnp.int32, (T, T), 0)
    col = lax.broadcasted_iota(jnp.int32, (T, T), 1)
    s = jnp.where((col <= row)[None, :, :], s, -jnp.inf)

    # Numerically stable softmax in f32; reciprocal on the EUP (approx).
    m = jnp.max(s, axis=-1, keepdims=True)
    p = jnp.exp(s - m)
    denom = jnp.sum(p, axis=-1, keepdims=True)
    wei = p * pl.reciprocal(denom, approx=True)

    # TODO(synk): nn.Dropout(0.2) skipped — eval-mode (identity) semantics.

    out = jnp.einsum("bqk,bkd->bqd", wei.astype(jnp.bfloat16), v,
                     preferred_element_type=jnp.float32)       # (Bb, T, H) f32
    o_ref[...] = out.astype(o_ref.dtype)


def _pick_batch_block(B, cap=16):
    """Largest batch block <= cap that divides B while keeping >= 2 grid steps
    (when B >= 2), so both v7x TensorCores get work; single step only if B==1."""
    best = 1
    for bb in range(1, min(B, cap) + 1):
        if B % bb == 0 and (B // bb >= 2 or B == 1):
            best = bb
    return best


def head_forward(x, w_key, w_query, w_value):
    """Single-head causal self-attention (eval mode).

    x:        (B, T, C)  float32
    w_key/w_query/w_value: PyTorch nn.Linear weights of shape (head_size, C)
    returns:  (B, T, head_size) float32
    """
    B, T, C = x.shape
    H = w_key.shape[0]
    assert C == n_embd and T <= block_size

    # Fused (C, 3H) weight: scale folded into the query projection,
    # cast once to bf16 (MXU-native input format) at the boundary.
    scale = H ** -0.5
    w_qkv = jnp.concatenate(
        [jnp.asarray(w_query).T * scale,      # (C, H)
         jnp.asarray(w_key).T,                # (C, H)
         jnp.asarray(w_value).T],             # (C, H)
        axis=1).astype(jnp.bfloat16)          # (C, 3H)
    x_bf16 = x.astype(jnp.bfloat16)

    bb = _pick_batch_block(B)
    grid = (B // bb,)

    grid_spec = pltpu.PrefetchScalarGridSpec(
        num_scalar_prefetch=0,
        grid=grid,
        in_specs=[
            pl.BlockSpec((bb, T, C), lambda b: (b, 0, 0)),
            pl.BlockSpec((C, 3 * H), lambda b: (0, 0)),
        ],
        out_specs=pl.BlockSpec((bb, T, H), lambda b: (b, 0, 0)),
    )

    return pl.pallas_call(
        _head_kernel,
        out_shape=jax.ShapeDtypeStruct((B, T, H), x.dtype),
        grid_spec=grid_spec,
        compiler_params=pltpu.CompilerParams(
            dimension_semantics=("parallel",)),
    )(x_bf16, w_qkv)


def _reference(x, w_key, w_query, w_value):
    """Pure-JAX f32 reference matching the PyTorch forward (eval mode)."""
    k = x @ w_key.T
    q = x @ w_query.T
    v = x @ w_value.T
    scale = k.shape[-1] ** -0.5
    wei = jnp.einsum("btd,bsd->bts", q, k) * scale
    T = x.shape[1]
    mask = jnp.tril(jnp.ones((T, T), dtype=bool))
    wei = jnp.where(mask, wei, -jnp.inf)
    wei = jax.nn.softmax(wei, axis=-1)
    return wei @ v


if __name__ == "__main__":
    key = jax.random.PRNGKey(0)
    kx, kk, kq, kv = jax.random.split(key, 4)

    B, T, C = 2, block_size, n_embd     # (2, 64, 384)
    head_size = 64

    x = jax.random.normal(kx, (B, T, C), dtype=jnp.float32)
    # deterministic "Linear(n_embd, head_size, bias=False)" weights: (H, C)
    bound = 1.0 / (C ** 0.5)
    w_key = jax.random.uniform(kk, (head_size, C), minval=-bound, maxval=bound)
    w_query = jax.random.uniform(kq, (head_size, C), minval=-bound, maxval=bound)
    w_value = jax.random.uniform(kv, (head_size, C), minval=-bound, maxval=bound)

    out = head_forward(x, w_key, w_query, w_value)
    out = jax.block_until_ready(out)

    ref = _reference(x, w_key, w_query, w_value)
    assert out.shape == (B, T, head_size)
    # bf16 MXU inputs (f32 accumulation) -> tolerance looser than the f32 run.
    assert jnp.allclose(out, ref, atol=3e-2, rtol=3e-2), "mismatch vs reference"

    print("KERNEL_OK")
</pallas_src>

<mosaic_0001>
module attributes {stable_mosaic.version = 11 : i64} {
  func.func @_head_kernel(%arg0: i32, %arg1: memref<1x64x384xbf16, #tpu.memory_space<vmem>>, %arg2: memref<384x192xbf16, #tpu.memory_space<vmem>>, %arg3: memref<1x64x64xf32, #tpu.memory_space<vmem>>) attributes {dimension_semantics = [#tpu.dimension_semantics<parallel>], iteration_bounds = array<i64: 2>, scalar_prefetch = 0 : i64, scratch_operands = 0 : i64, tpu.core_type = #tpu.core_type<tc>, window_params = [{transform_indices = @transform_0, window_bounds = array<i64: 1, 64, 384>}, {pipeline_mode = #tpu.pipeline_mode<synchronous>, transform_indices = @transform_1, window_bounds = array<i64: 384, 192>}, {transform_indices = @transform_2, window_bounds = array<i64: 1, 64, 64>}]} {
    %c0 = arith.constant 0 : index
    %c0_0 = arith.constant 0 : index
    %c0_1 = arith.constant 0 : index
    %0 = vector.load %arg1[%c0, %c0_0, %c0_1] : memref<1x64x384xbf16, #tpu.memory_space<vmem>>, vector<1x64x384xbf16>
    %c0_2 = arith.constant 0 : index
    %c0_3 = arith.constant 0 : index
    %1 = vector.load %arg2[%c0_2, %c0_3] : memref<384x192xbf16, #tpu.memory_space<vmem>>, vector<384x192xbf16>
    %2 = vector.shape_cast %0 : vector<1x64x384xbf16> to vector<64x384xbf16>
    %cst = arith.constant dense<0.000000e+00> : vector<64x192xf32>
    %3 = tpu.matmul %2, %1, %cst {dimension_numbers = #tpu.dot_dimension_numbers<[1], [0], [0], [1], [0, 0, 1, 1], [], []>} : vector<64x384xbf16>, vector<384x192xbf16>, vector<64x192xf32> -> vector<64x192xf32>
    %4 = vector.shape_cast %3 : vector<64x192xf32> to vector<1x64x192xf32>
    %5 = vector.extract_strided_slice %4 {offsets = [0, 0, 0], sizes = [1, 64, 64], strides = [1, 1, 1]} : vector<1x64x192xf32> to vector<1x64x64xf32>
    %6 = arith.truncf %5 : vector<1x64x64xf32> to vector<1x64x64xbf16>
    %7 = vector.extract_strided_slice %4 {offsets = [0, 0, 64], sizes = [1, 64, 64], strides = [1, 1, 1]} : vector<1x64x192xf32> to vector<1x64x64xf32>
    %8 = arith.truncf %7 : vector<1x64x64xf32> to vector<1x64x64xbf16>
    %9 = vector.extract_strided_slice %4 {offsets = [0, 0, 128], sizes = [1, 64, 64], strides = [1, 1, 1]} : vector<1x64x192xf32> to vector<1x64x64xf32>
    %10 = arith.truncf %9 : vector<1x64x64xf32> to vector<1x64x64xbf16>
    "tpu.trace_start"() <{level = 10 : i32, message = "bqd,bkd->bqk"}> : () -> ()
    %cst_4 = arith.constant dense<0.000000e+00> : vector<1x64x64xf32>
    %11 = tpu.matmul %6, %8, %cst_4 {dimension_numbers = #tpu.dot_dimension_numbers<[2], [2], [1], [1], [0, 0, 0, 1, 1, 1], [0], [0]>} : vector<1x64x64xbf16>, vector<1x64x64xbf16>, vector<1x64x64xf32> -> vector<1x64x64xf32>
    "tpu.trace_stop"() : () -> ()
    %12 = tpu.iota {dimensions = array<i32: 0>} : vector<64x64xi32>
    %13 = tpu.iota {dimensions = array<i32: 1>} : vector<64x64xi32>
    %14 = arith.cmpi sle, %13, %12 : vector<64x64xi32>
    %15 = vector.shape_cast %14 : vector<64x64xi1> to vector<1x64x64xi1>
    %cst_5 = arith.constant 0xFF800000 : f32
    %16 = vector.broadcast %cst_5 : f32 to vector<1x64x64xf32>
    %17 = arith.select %15, %11, %16 : vector<1x64x64xi1>, vector<1x64x64xf32>
    %cst_6 = arith.constant dense<0xFF800000> : vector<1x64xf32>
    %18 = vector.multi_reduction <maximumf>, %17, %cst_6 [2] : vector<1x64x64xf32> to vector<1x64xf32>
    %19 = vector.shape_cast %18 : vector<1x64xf32> to vector<1x64x1xf32>
    %20 = vector.broadcast %19 : vector<1x64x1xf32> to vector<1x64x64xf32>
    %21 = arith.subf %17, %20 : vector<1x64x64xf32>
    %22 = math.exp %21 : vector<1x64x64xf32>
    %cst_7 = arith.constant dense<0.000000e+00> : vector<1x64xf32>
    %23 = vector.multi_reduction <add>, %22, %cst_7 [2] : vector<1x64x64xf32> to vector<1x64xf32>
    %24 = vector.shape_cast %23 : vector<1x64xf32> to vector<1x64x1xf32>
    %25 = tpu.reciprocal %24 {approx = true} : vector<1x64x1xf32> -> vector<1x64x1xf32>
    %26 = vector.broadcast %25 : vector<1x64x1xf32> to vector<1x64x64xf32>
    %27 = arith.mulf %22, %26 : vector<1x64x64xf32>
    %28 = arith.truncf %27 : vector<1x64x64xf32> to vector<1x64x64xbf16>
    "tpu.trace_start"() <{level = 10 : i32, message = "bqk,bkd->bqd"}> : () -> ()
    %cst_8 = arith.constant dense<0.000000e+00> : vector<1x64x64xf32>
    %29 = tpu.matmul %28, %10, %cst_8 {dimension_numbers = #tpu.dot_dimension_numbers<[2], [1], [1], [2], [0, 0, 0, 1, 1, 2], [0], [0]>} : vector<1x64x64xbf16>, vector<1x64x64xbf16>, vector<1x64x64xf32> -> vector<1x64x64xf32>
    "tpu.trace_stop"() : () -> ()
    %c0_9 = arith.constant 0 : index
    %c0_10 = arith.constant 0 : index
    %c0_11 = arith.constant 0 : index
    %30 = vector.load %arg3[%c0_9, %c0_10, %c0_11] : memref<1x64x64xf32, #tpu.memory_space<vmem>>, vector<1x64x64xf32>
    tpu.vector_store %arg3[%c0_9, %c0_10, %c0_11], %29 {strides = array<i32>} : memref<1x64x64xf32, #tpu.memory_space<vmem>>, vector<1x64x64xf32>,
    return
  }
  func.func @transform_0(%arg0: i32) -> (i32, i32, i32) {
    %c0_i32 = arith.constant 0 : i32
    %c0_i32_0 = arith.constant 0 : i32
    %c0_i32_1 = arith.constant 0 : i32
    return %arg0, %c0_i32, %c0_i32_0 : i32, i32, i32
  }
  func.func @transform_1(%arg0: i32) -> (i32, i32) {
    %c0_i32 = arith.constant 0 : i32
    %c0_i32_0 = arith.constant 0 : i32
    %c0_i32_1 = arith.constant 0 : i32
    return %c0_i32, %c0_i32_0 : i32, i32
  }
  func.func @transform_2(%arg0: i32) -> (i32, i32, i32) {
    %c0_i32 = arith.constant 0 : i32
    %c0_i32_0 = arith.constant 0 : i32
    %c0_i32_1 = arith.constant 0 : i32
    return %arg0, %c0_i32, %c0_i32_0 : i32, i32, i32
  }
}

</mosaic_0001>

<llo_original>
// kernel: tpu_custom_call.1
$region0: #{tpu_custom_call.1}
  #allocation0 [shape = 'u32[]', space=smem, size = 0x4, offset = 0x4, fixed_abs, tag = 'smem constant byte address 0x4 - core index']
  #allocation1 [shape = 'u32[144,128]{1,0:T(1,128)}', space=vmem, size = 0x12000, scoped, tag = 'internal scratch']
  %s0 = inlined_call_operand.vmem [shape: bf16[2,64,384], index: 0, kind: input, shape index: {}]
  %s1 = inlined_call_operand.vmem [shape: bf16[384,192], index: 1, kind: input, shape index: {}]
  %s2 = inlined_call_operand.hbm [shape: f32[2,64,64], index: 2, kind: output, shape index: {}]
  %s3 = sld [smem:[#allocation0]]
  $region41: #{tpu_custom_call.1} parent=0
    _
  %s5 = ssub.s32 1, %s3
  %s6 = scalar_select 0, %s5, %s3
  $region1: #{tpu_custom_call.1} parent=0
    #allocation2 [shape = 'u8[65536]{0}', space=vmem, size = 0x10000, scoped, tag = 'output window, operand 0']
    #allocation3 [shape = 's32[2]{0}', space=sflag, size = 0x8, scoped, tag = 'scoped memory for tpu_custom_call.1']
    %7 = vsyncpa [#allocation3], 0
    %s8 = scalar_lea.sflag [#allocation3], 1
    %9 = vsyncpa %s8, 0
    loop: start=0, step=1, limit=4
    $region2: #{tpu_custom_call.1} parent=1 // loop_pre_header
      _
    $region3: #{tpu_custom_call.1} parent=1 // loop_header
      %s11 = sphi 0, %s15
      %p12 = scmp.ge.s32.totalorder %s11, 4
      %s21 = sphi 0, %s23
      %s24 = sphi 0, %s21
      %s25 = sphi 0, %s24
      %s41 = sphi 0, %s25
      %s45 = sphi 0, %s45
      %s47 = sphi 0, %s45
      %s48 = sphi 0, %s47
      %s62 = sphi 0, %s48
      %s68 = sphi 0, %s70
      %s71 = sphi 0, %s68
      %s72 = sphi 0, %s71
      %s88 = sphi 0, %s72
    $region4: #{tpu_custom_call.1} parent=1 // loop_header_branch
      %14 = sbr.rel (%p12) target = $region8
    $region5: #{tpu_custom_call.1} parent=1 // loop_body
      %s16 = ssub.s32 %s11, 1
      %s17 = ssub.s32 %s11, 2
      %s18 = sadd.s32 %s11, 1
      %s19 = ssub.s32 %s11, %s18
      %p20 = scmp.eq.s32.totalorder %s19, 0
      %s22 = sadd.s32 %s21, 1
      %s23 = scalar_select %p20, %s21, %s22
      %p26 = pneg %p20
      %p27 = scmp.eq.s32.totalorder %s11, 1
      %p28 = por %p26, %p27
      %p29 = scmp.ne.s32.totalorder %s21, %s24
      %p30 = scmp.eq.s32.totalorder %s11, 0
      %p31 = por %p29, %p30
      %p32 = scmp.ne.s32.totalorder %s21, %s24
      %p33 = scmp.eq.s32.totalorder %s16, 1
      %p34 = por %p32, %p33
      %p35 = scmp.ne.s32.totalorder %s24, %s25
      %p36 = scmp.eq.s32.totalorder %s16, 0
      %p37 = por %p35, %p36
      %p38 = scmp.ne.s32.totalorder %s24, %s25
      %p39 = scmp.eq.s32.totalorder %s17, 1
      %p40 = por %p38, %p39
      %p42 = scmp.ne.s32.totalorder %s25, %s41
      %p43 = scmp.eq.s32.totalorder %s17, 0
      %p44 = por %p42, %p43
      %s46 = sadd.s32 %s45, 1
      %p49 = scmp.eq.s32.totalorder %s11, 1
      %p50 = scmp.ne.s32.totalorder %s45, %s47
      %p51 = scmp.eq.s32.totalorder %s11, 0
      %p52 = por %p50, %p51
      %p53 = scmp.ne.s32.totalorder %s45, %s47
      %p54 = scmp.eq.s32.totalorder %s16, 1
      %p55 = por %p53, %p54
      %p56 = scmp.ne.s32.totalorder %s47, %s48
      %p57 = scmp.eq.s32.totalorder %s16, 0
      %p58 = por %p56, %p57
      %p59 = scmp.ne.s32.totalorder %s47, %s48
      %p60 = scmp.eq.s32.totalorder %s17, 1
      %p61 = por %p59, %p60
      %p63 = scmp.ne.s32.totalorder %s48, %s62
      %p64 = scmp.eq.s32.totalorder %s17, 0
      %p65 = por %p63, %p64
      %s66 = ssub.s32 %s11, %s18
      %p67 = scmp.eq.s32.totalorder %s66, 0
      %s69 = sadd.s32 %s68, 1
      %s70 = scalar_select %p67, %s68, %s69
      %p73 = pneg %p67
      %p74 = scmp.eq.s32.totalorder %s11, 1
      %p75 = por %p73, %p74
      %p76 = scmp.ne.s32.totalorder %s68, %s71
      %p77 = scmp.eq.s32.totalorder %s11, 0
      %p78 = por %p76, %p77
      %p79 = scmp.ne.s32.totalorder %s68, %s71
      %p80 = scmp.eq.s32.totalorder %s16, 1
      %p81 = por %p79, %p80
      %p82 = scmp.ne.s32.totalorder %s71, %s72
      %p83 = scmp.eq.s32.totalorder %s16, 0
      %p84 = por %p82, %p83
      %p85 = scmp.ne.s32.totalorder %s71, %s72
      %p86 = scmp.eq.s32.totalorder %s17, 1
      %p87 = por %p85, %p86
      %p89 = scmp.ne.s32.totalorder %s72, %s88
      %p90 = scmp.eq.s32.totalorder %s17, 0
      %p91 = por %p89, %p90
      %p92 = scmp.le.s32.totalorder 1, %s11
      %p93 = scmp.lt.s32.totalorder %s11, 3
      %p94 = pnand %p92, %p93
      %p95 = pneg %p94
      // Predicated region
      $region9: #{tpu_custom_call.1} parent=5 // pred_check
        _
      $region10: #{tpu_custom_call.1} parent=5 // pred_check_branch
        %97 = sbr.rel (%p94) target = $region12
      $region11: #{tpu_custom_call.1} parent=5 // pred_region
        %s98 = ssub.s32 %s11, 1
        // Predicated region
        $region13: #{tpu_custom_call.1} parent=11 // pred_check
          %p99 = pneg %p58
        $region14: #{tpu_custom_call.1} parent=11 // pred_check_branch
          %101 = sbr.rel (%p99) target = $region16
        $region15: #{tpu_custom_call.1} parent=11 // pred_region
          _
        $region16: #{tpu_custom_call.1} parent=11 // pred_fallthru
          _
      $region12: #{tpu_custom_call.1} parent=5 // pred_fallthru
        _
      %p102 = scmp.lt.s32.totalorder %s11, 2
      // Predicated region
      $region17: #{tpu_custom_call.1} parent=5 // pred_check
        %p103 = pneg %p102
      $region18: #{tpu_custom_call.1} parent=5 // pred_check_branch
        %105 = sbr.rel (%p103) target = $region20
      $region19: #{tpu_custom_call.1} parent=5 // pred_region
        // Predicated region
        $region21: #{tpu_custom_call.1} parent=19 // pred_check
          %p106 = pneg %p31
        $region22: #{tpu_custom_call.1} parent=19 // pred_check_branch
          %108 = sbr.rel (%p106) target = $region24
        $region23: #{tpu_custom_call.1} parent=19 // pred_region
          %p109 = scmp.lt.s32.totalorder %s11, 1
          %s110 = scalar_select %p109, %s11, 1
          %s111 = smul.addr %s110, 24
          %s112 = smul.addr %s111, 4
          %s113 = scalar_lea.vmem %s0, %s112
        $region24: #{tpu_custom_call.1} parent=19 // pred_fallthru
          _
      $region20: #{tpu_custom_call.1} parent=5 // pred_fallthru
        _
      %p114 = scmp.le.s32.totalorder 1, %s11
      %p115 = scmp.lt.s32.totalorder %s11, 3
      %p116 = pnand %p114, %p115
      %p117 = pneg %p116
      // Predicated region
      $region25: #{tpu_custom_call.1} parent=5 // pred_check
        _
      $region26: #{tpu_custom_call.1} parent=5 // pred_check_branch
        %119 = sbr.rel (%p116) target = $region28
      $region27: #{tpu_custom_call.1} parent=5 // pred_region
        %s120 = ssub.s32 %s11, 1
        %p121 = scmp.lt.s32.totalorder %s16, 1
        %s122 = scalar_select %p121, %s16, 1
        %s123 = smul.addr %s122, 24
        %s124 = smul.addr %s123, 4
        %s125 = scalar_lea.vmem %s0, %s124
        %p126 = pneg %p37
        %p127 = pneg %p34
        %p128 = pneg %p58
        %p129 = pneg %p55
        %p130 = pneg %p84
        %p131 = pneg %p81
        %s132 = sand.u32 %s71, 1
        %s133 = scalar_lea.sflag [#allocation3], %s132
        %s134 = sand.u32 %s71, 1
        %s135 = smul.addr %s134, 64
        %s136 = scalar_lea.vmem [#allocation2], %s135
        %p137 = scmp.lt.s32.totalorder %s16, 1
        %s138 = scalar_select %p137, %s16, 1
        %s139 = smul.addr %s138, 24
        %s140 = smul.addr %s139, 4
        %s141 = scalar_lea.vmem %s0, %s140
        %v143 = vld [vmem:[%s141] sm:$0xff]
        %v144 = vld [vmem:[%s141 + $0x8] sm:$0xf]
        %v145 = vld [vmem:[%s141 + $0xc] sm:$0xff]
        %v146 = vld [vmem:[%s141 + $0x14] sm:$0xf]
        %v147 = vld [vmem:[%s141 + $0x18] sm:$0xff]
        %v148 = vld [vmem:[%s141 + $0x20] sm:$0xf]
        %v149 = vld [vmem:[%s141 + $0x24] sm:$0xff]
        %v150 = vld [vmem:[%s141 + $0x2c] sm:$0xf]
        %v151 = vld [vmem:[%s141 + $0x30] sm:$0xff]
        %v152 = vld [vmem:[%s141 + $0x38] sm:$0xf]
        %v153 = vld [vmem:[%s141 + $0x3c] sm:$0xff]
        %v154 = vld [vmem:[%s141 + $0x44] sm:$0xf]
        %v155 = vld [vmem:[%s141 + $0x48] sm:$0xff]
        %v156 = vld [vmem:[%s141 + $0x50] sm:$0xf]
        %v157 = vld [vmem:[%s141 + $0x54] sm:$0xff]
        %v158 = vld [vmem:[%s141 + $0x5c] sm:$0xf]
        %v159 = vld [vmem:[%s1] sm:$0xff]
        %v160 = vld [vmem:[%s1 + $0x8] sm:$0xff]
        %v161 = vld [vmem:[%s1 + $0x10] sm:$0xff]
        %v162 = vld [vmem:[%s1 + $0x18] sm:$0xff]
        %v163 = vld [vmem:[%s1 + $0x20] sm:$0xff]
        %v164 = vld [vmem:[%s1 + $0x28] sm:$0xff]
        %v165 = vld [vmem:[%s1 + $0x30] sm:$0xff]
        %v166 = vld [vmem:[%s1 + $0x38] sm:$0xff]
        %v167 = vld [vmem:[%s1 + $0x40] sm:$0xff]
        %v168 = vld [vmem:[%s1 + $0x48] sm:$0xff]
        %v169 = vld [vmem:[%s1 + $0x50] sm:$0xff]
        %v170 = vld [vmem:[%s1 + $0x58] sm:$0xff]
        %v171 = vld [vmem:[%s1 + $0x60] sm:$0xff]
        %v172 = vld [vmem:[%s1 + $0x68] sm:$0xff]
        %v173 = vld [vmem:[%s1 + $0x70] sm:$0xff]
        %v174 = vld [vmem:[%s1 + $0x78] sm:$0xff]
        %v175 = vld [vmem:[%s1 + $0x80] sm:$0xff]
        %v176 = vld [vmem:[%s1 + $0x88] sm:$0xff]
        %v177 = vld [vmem:[%s1 + $0x90] sm:$0xff]
        %v178 = vld [vmem:[%s1 + $0x98] sm:$0xff]
        %v179 = vld [vmem:[%s1 + $0xa0] sm:$0xff]
        %v180 = vld [vmem:[%s1 + $0xa8] sm:$0xff]
        %v181 = vld [vmem:[%s1 + $0xb0] sm:$0xff]
        %v182 = vld [vmem:[%s1 + $0xb8] sm:$0xff]
        %v183 = vld [vmem:[%s1 + $0xc0] sm:$0xff]
        %v184 = vld [vmem:[%s1 + $0xc8] sm:$0xff]
        %v185 = vld [vmem:[%s1 + $0xd0] sm:$0xff]
        %v186 = vld [vmem:[%s1 + $0xd8] sm:$0xff]
        %v187 = vld [vmem:[%s1 + $0xe0] sm:$0xff]
        %v188 = vld [vmem:[%s1 + $0xe8] sm:$0xff]
        %v189 = vld [vmem:[%s1 + $0xf0] sm:$0xff]
        %v190 = vld [vmem:[%s1 + $0xf8] sm:$0xff]
        %v191 = vld [vmem:[%s1 + $0x100] sm:$0xff]
        %v192 = vld [vmem:[%s1 + $0x108] sm:$0xff]
        %v193 = vld [vmem:[%s1 + $0x110] sm:$0xff]
        %v194 = vld [vmem:[%s1 + $0x118] sm:$0xff]
        %v195 = vld [vmem:[%s1 + $0x120] sm:$0xff]
        %v196 = vld [vmem:[%s1 + $0x128] sm:$0xff]
        %v197 = vld [vmem:[%s1 + $0x130] sm:$0xff]
        %v198 = vld [vmem:[%s1 + $0x138] sm:$0xff]
        %v199 = vld [vmem:[%s1 + $0x140] sm:$0xff]
        %v200 = vld [vmem:[%s1 + $0x148] sm:$0xff]
        %v201 = vld [vmem:[%s1 + $0x150] sm:$0xff]
        %v202 = vld [vmem:[%s1 + $0x158] sm:$0xff]
        %v203 = vld [vmem:[%s1 + $0x160] sm:$0xff]
        %v204 = vld [vmem:[%s1 + $0x168] sm:$0xff]
        %v205 = vld [vmem:[%s1 + $0x170] sm:$0xff]
        %v206 = vld [vmem:[%s1 + $0x178] sm:$0xff]
        %v223 = vunpack.c.l.b16 %v143
        %v224 = vunpack.c.h.b16 %v143
        %v225 = vunpack.c.l.b16 %v144
        %v226 = vunpack.c.l.b16 %v145
        %v227 = vunpack.c.h.b16 %v145
        %v228 = vunpack.c.l.b16 %v146
        %v229 = vunpack.c.l.b16 %v147
        %v230 = vunpack.c.h.b16 %v147
        %v231 = vunpack.c.l.b16 %v148
        %v232 = vunpack.c.l.b16 %v149
        %v233 = vunpack.c.h.b16 %v149
        %v234 = vunpack.c.l.b16 %v150
        %v235 = vunpack.c.l.b16 %v151
        %v236 = vunpack.c.h.b16 %v151
        %v237 = vunpack.c.l.b16 %v152
        %v238 = vunpack.c.l.b16 %v153
        %v239 = vunpack.c.h.b16 %v153
        %v240 = vunpack.c.l.b16 %v154
        %v241 = vunpack.c.l.b16 %v155
        %v242 = vunpack.c.h.b16 %v155
        %v243 = vunpack.c.l.b16 %v156
        %v244 = vunpack.c.l.b16 %v157
        %v245 = vunpack.c.h.b16 %v157
        %v246 = vunpack.c.l.b16 %v158
        %v247 = vpack.c.b16 %v226, %v223
        %v248 = vpack.c.b16 %v227, %v224
        %v249 = vpack.c.b16 %v228, %v225
        %v250 = vpack.c.b16 %v232, %v229
        %v251 = vpack.c.b16 %v233, %v230
        %v252 = vpack.c.b16 %v234, %v231
        %v253 = vpack.c.b16 %v238, %v235
        %v254 = vpack.c.b16 %v239, %v236
        %v255 = vpack.c.b16 %v240, %v237
        %v256 = vpack.c.b16 %v244, %v241
        %v257 = vpack.c.b16 %v245, %v242
        %v258 = vpack.c.b16 %v246, %v243
        %v319 = vunpack.c.l.b16 %v159
        %v320 = vunpack.c.h.b16 %v159
        %v321 = vunpack.c.l.b16 %v160
        %v322 = vunpack.c.h.b16 %v160
        %v323 = vunpack.c.l.b16 %v161
        %v324 = vunpack.c.h.b16 %v161
        %v325 = vunpack.c.l.b16 %v162
        %v326 = vunpack.c.h.b16 %v162
        %v327 = vunpack.c.l.b16 %v163
        %v328 = vunpack.c.h.b16 %v163
        %v329 = vunpack.c.l.b16 %v164
        %v330 = vunpack.c.h.b16 %v164
        %v331 = vunpack.c.l.b16 %v165
        %v332 = vunpack.c.h.b16 %v165
        %v333 = vunpack.c.l.b16 %v166
        %v334 = vunpack.c.h.b16 %v166
        %v335 = vunpack.c.l.b16 %v167
        %v336 = vunpack.c.h.b16 %v167
        %v337 = vunpack.c.l.b16 %v168
        %v338 = vunpack.c.h.b16 %v168
        %v339 = vunpack.c.l.b16 %v169
        %v340 = vunpack.c.h.b16 %v169
        %v341 = vunpack.c.l.b16 %v170
        %v342 = vunpack.c.h.b16 %v170
        %v343 = vunpack.c.l.b16 %v171
        %v344 = vunpack.c.h.b16 %v171
        %v345 = vunpack.c.l.b16 %v172
        %v346 = vunpack.c.h.b16 %v172
        %v347 = vunpack.c.l.b16 %v173
        %v348 = vunpack.c.h.b16 %v173
        %v349 = vunpack.c.l.b16 %v174
        %v350 = vunpack.c.h.b16 %v174
        %v351 = vunpack.c.l.b16 %v175
        %v352 = vunpack.c.h.b16 %v175
        %v353 = vunpack.c.l.b16 %v176
        %v354 = vunpack.c.h.b16 %v176
        %v355 = vunpack.c.l.b16 %v177
        %v356 = vunpack.c.h.b16 %v177
        %v357 = vunpack.c.l.b16 %v178
        %v358 = vunpack.c.h.b16 %v178
        %v359 = vunpack.c.l.b16 %v179
        %v360 = vunpack.c.h.b16 %v179
        %v361 = vunpack.c.l.b16 %v180
        %v362 = vunpack.c.h.b16 %v180
        %v363 = vunpack.c.l.b16 %v181
        %v364 = vunpack.c.h.b16 %v181
        %v365 = vunpack.c.l.b16 %v182
        %v366 = vunpack.c.h.b16 %v182
        %v367 = vunpack.c.l.b16 %v183
        %v368 = vunpack.c.h.b16 %v183
        %v369 = vunpack.c.l.b16 %v184
        %v370 = vunpack.c.h.b16 %v184
        %v371 = vunpack.c.l.b16 %v185
        %v372 = vunpack.c.h.b16 %v185
        %v373 = vunpack.c.l.b16 %v186
        %v374 = vunpack.c.h.b16 %v186
        %v375 = vunpack.c.l.b16 %v187
        %v376 = vunpack.c.h.b16 %v187
        %v377 = vunpack.c.l.b16 %v188
        %v378 = vunpack.c.h.b16 %v188
        %v379 = vunpack.c.l.b16 %v189
        %v380 = vunpack.c.h.b16 %v189
        %v381 = vunpack.c.l.b16 %v190
        %v382 = vunpack.c.h.b16 %v190
        %v383 = vunpack.c.l.b16 %v191
        %v384 = vunpack.c.h.b16 %v191
        %v385 = vunpack.c.l.b16 %v192
        %v386 = vunpack.c.h.b16 %v192
        %v387 = vunpack.c.l.b16 %v193
        %v388 = vunpack.c.h.b16 %v193
        %v389 = vunpack.c.l.b16 %v194
        %v390 = vunpack.c.h.b16 %v194
        %v391 = vunpack.c.l.b16 %v195
        %v392 = vunpack.c.h.b16 %v195
        %v393 = vunpack.c.l.b16 %v196
        %v394 = vunpack.c.h.b16 %v196
        %v395 = vunpack.c.l.b16 %v197
        %v396 = vunpack.c.h.b16 %v197
        %v397 = vunpack.c.l.b16 %v198
        %v398 = vunpack.c.h.b16 %v198
        %v399 = vunpack.c.l.b16 %v199
        %v400 = vunpack.c.h.b16 %v199
        %v401 = vunpack.c.l.b16 %v200
        %v402 = vunpack.c.h.b16 %v200
        %v403 = vunpack.c.l.b16 %v201
        %v404 = vunpack.c.h.b16 %v201
        %v405 = vunpack.c.l.b16 %v202
        %v406 = vunpack.c.h.b16 %v202
        %v407 = vunpack.c.l.b16 %v203
        %v408 = vunpack.c.h.b16 %v203
        %v409 = vunpack.c.l.b16 %v204
        %v410 = vunpack.c.h.b16 %v204
        %v411 = vunpack.c.l.b16 %v205
        %v412 = vunpack.c.h.b16 %v205
        %v413 = vunpack.c.l.b16 %v206
        %v414 = vunpack.c.h.b16 %v206
        %v415 = vpack.c.b16 %v321, %v319
        %v416 = vpack.c.b16 %v322, %v320
        %v417 = vpack.c.b16 %v325, %v323
        %v418 = vpack.c.b16 %v326, %v324
        %v419 = vpack.c.b16 %v329, %v327
        %v420 = vpack.c.b16 %v330, %v328
        %v421 = vpack.c.b16 %v333, %v331
        %v422 = vpack.c.b16 %v334, %v332
        %v423 = vpack.c.b16 %v337, %v335
        %v424 = vpack.c.b16 %v338, %v336
        %v425 = vpack.c.b16 %v341, %v339
        %v426 = vpack.c.b16 %v342, %v340
        %v427 = vpack.c.b16 %v345, %v343
        %v428 = vpack.c.b16 %v346, %v344
        %v429 = vpack.c.b16 %v349, %v347
        %v430 = vpack.c.b16 %v350, %v348
        %v431 = vpack.c.b16 %v353, %v351
        %v432 = vpack.c.b16 %v354, %v352
        %v433 = vpack.c.b16 %v357, %v355
        %v434 = vpack.c.b16 %v358, %v356
        %v435 = vpack.c.b16 %v361, %v359
        %v436 = vpack.c.b16 %v362, %v360
        %v437 = vpack.c.b16 %v365, %v363
        %v438 = vpack.c.b16 %v366, %v364
        %v439 = vpack.c.b16 %v369, %v367
        %v440 = vpack.c.b16 %v370, %v368
        %v441 = vpack.c.b16 %v373, %v371
        %v442 = vpack.c.b16 %v374, %v372
        %v443 = vpack.c.b16 %v377, %v375
        %v444 = vpack.c.b16 %v378, %v376
        %v445 = vpack.c.b16 %v381, %v379
        %v446 = vpack.c.b16 %v382, %v380
        %v447 = vpack.c.b16 %v385, %v383
        %v448 = vpack.c.b16 %v386, %v384
        %v449 = vpack.c.b16 %v389, %v387
        %v450 = vpack.c.b16 %v390, %v388
        %v451 = vpack.c.b16 %v393, %v391
        %v452 = vpack.c.b16 %v394, %v392
        %v453 = vpack.c.b16 %v397, %v395
        %v454 = vpack.c.b16 %v398, %v396
        %v455 = vpack.c.b16 %v401, %v399
        %v456 = vpack.c.b16 %v402, %v400
        %v457 = vpack.c.b16 %v405, %v403
        %v458 = vpack.c.b16 %v406, %v404
        %v459 = vpack.c.b16 %v409, %v407
        %v460 = vpack.c.b16 %v410, %v408
        %v461 = vpack.c.b16 %v413, %v411
        %v462 = vpack.c.b16 %v414, %v412
        %511 = vmatprep.subr.bf16.mxu0 %v416
        %512 = vmatpush1.bf16.msra.mxu0 %v415
        %513 = vmatprep.subr.bf16.mxu0 %v418
        %514 = vmatpush1.bf16.msra.mxu0 %v417
        %515 = vmatprep.subr.bf16.mxu0 %v420
        %516 = vmatpush1.bf16.msra.mxu0 %v419
        %517 = vmatprep.subr.bf16.mxu0 %v422
        %518 = vmatpush1.bf16.msra.mxu0 %v421
        %519 = vmatprep.subr.bf16.mxu0 %v424
        %520 = vmatpush1.bf16.msra.mxu0 %v423
        %521 = vmatprep.subr.bf16.mxu0 %v426
        %522 = vmatpush1.bf16.msra.mxu0 %v425
        %523 = vmatprep.subr.bf16.mxu0 %v428
        %524 = vmatpush1.bf16.msra.mxu0 %v427
        %525 = vmatprep.subr.bf16.mxu0 %v430
        %526 = vmatpush1.bf16.msra.mxu0 %v429
        %527 = vmatprep.subr.bf16.mxu0 %v432
        %528 = vmatpush1.bf16.msra.mxu0 %v431
        %529 = vmatprep.subr.bf16.mxu0 %v434
        %530 = vmatpush1.bf16.msra.mxu0 %v433
        %531 = vmatprep.subr.bf16.mxu0 %v436
        %532 = vmatpush1.bf16.msra.mxu0 %v435
        %533 = vmatprep.subr.bf16.mxu0 %v438
        %534 = vmatpush1.bf16.msra.mxu0 %v437
        %535 = vmatprep.subr.bf16.mxu0 %v440
        %536 = vmatpush1.bf16.msra.mxu0 %v439
        %537 = vmatprep.subr.bf16.mxu0 %v442
        %538 = vmatpush1.bf16.msra.mxu0 %v441
        %539 = vmatprep.subr.bf16.mxu0 %v444
        %540 = vmatpush1.bf16.msra.mxu0 %v443
        %541 = vmatprep.subr.bf16.mxu0 %v446
        %542 = vmatpush1.bf16.msra.mxu0 %v445
        %543 = vmatprep.mubr.bf16.mxu0 %v248
        %544 = vmatmul.mubr.bf16.gmra.mrb[0].mxu0 %v247
        %v545 = vpop.f32.mrb[0].mxu0
        %v546 = vadd.f32 0.0, %v545
        %v547 = vpop.f32.mrb[0].mxu0
        %v548 = vadd.f32 0.0, %v547
        %v549 = vpop.f32.mrb[0].mxu0
        %v550 = vadd.f32 0.0, %v549
        %v551 = vpop.f32.mrb[0].mxu0
        %v552 = vadd.f32 0.0, %v551
        %553 = vmatprep.mubr.bf16.mxu0 %v251
        %554 = vmatmul.mubr.bf16.gmra.mrb[0].mxu0 %v250
        %v555 = vpop.f32.mrb[0].mxu0
        %v556 = vadd.f32 0.0, %v555
        %v557 = vpop.f32.mrb[0].mxu0
        %v558 = vadd.f32 0.0, %v557
        %v559 = vpop.f32.mrb[0].mxu0
        %v560 = vadd.f32 0.0, %v559
        %v561 = vpop.f32.mrb[0].mxu0
        %v562 = vadd.f32 0.0, %v561
        %563 = vmatprep.mubr.bf16.mxu0 %v254
        %564 = vmatmul.mubr.bf16.gmra.mrb[0].mxu0 %v253
        %v565 = vpop.f32.mrb[0].mxu0
        %v566 = vadd.f32 0.0, %v565
        %v567 = vpop.f32.mrb[0].mxu0
        %v568 = vadd.f32 0.0, %v567
        %v569 = vpop.f32.mrb[0].mxu0
        %v570 = vadd.f32 0.0, %v569
        %v571 = vpop.f32.mrb[0].mxu0
        %v572 = vadd.f32 0.0, %v571
        %573 = vmatprep.mubr.bf16.mxu0 %v257
        %574 = vmatmul.mubr.bf16.gmra.mrb[0].mxu0 %v256
        %v575 = vpop.f32.mrb[0].mxu0
        %v576 = vadd.f32 0.0, %v575
        %v577 = vpop.f32.mrb[0].mxu0
        %v578 = vadd.f32 0.0, %v577
        %v579 = vpop.f32.mrb[0].mxu0
        %v580 = vadd.f32 0.0, %v579
        %v581 = vpop.f32.mrb[0].mxu0
        %v582 = vadd.f32 0.0, %v581
        %583 = vdwg.mxu0
        %584 = vmatprep.subr.bf16.mxu0 %v448
        %585 = vmatpush1.bf16.msra.mxu0 %v447
        %586 = vmatprep.subr.bf16.mxu0 %v450
        %587 = vmatpush1.bf16.msra.mxu0 %v449
        %588 = vmatprep.subr.bf16.mxu0 %v452
        %589 = vmatpush1.bf16.msra.mxu0 %v451
        %590 = vmatprep.subr.bf16.mxu0 %v454
        %591 = vmatpush1.bf16.msra.mxu0 %v453
        %592 = vmatprep.subr.bf16.mxu0 %v456
        %593 = vmatpush1.bf16.msra.mxu0 %v455
        %594 = vmatprep.subr.bf16.mxu0 %v458
        %595 = vmatpush1.bf16.msra.mxu0 %v457
        %596 = vmatprep.subr.bf16.mxu0 %v460
        %597 = vmatpush1.bf16.msra.mxu0 %v459
        %598 = vmatprep.subr.bf16.mxu0 %v462
        %599 = vmatpush1.bf16.msra.mxu0 %v461
        %600 = vmatprep.subr.bf16.mxu0 0
        %601 = vmatpush1.bf16.msra.mxu0 0
        %602 = vmatprep.subr.bf16.mxu0 0
        %603 = vmatpush1.bf16.msra.mxu0 0
        %604 = vmatprep.subr.bf16.mxu0 0
        %605 = vmatpush1.bf16.msra.mxu0 0
        %606 = vmatprep.subr.bf16.mxu0 0
        %607 = vmatpush1.bf16.msra.mxu0 0
        %608 = vmatprep.subr.bf16.mxu0 0
        %609 = vmatpush1.bf16.msra.mxu0 0
        %610 = vmatprep.subr.bf16.mxu0 0
        %611 = vmatpush1.bf16.msra.mxu0 0
        %612 = vmatprep.subr.bf16.mxu0 0
        %613 = vmatpush1.bf16.msra.mxu0 0
        %614 = vmatprep.subr.bf16.mxu0 0
        %615 = vmatpush1.bf16.msra.mxu0 0
        %616 = vmatprep.mubr.bf16.mxu0 0
        %617 = vmatmul.mubr.bf16.gmra.mrb[0].mxu0 %v249
        %v618 = vpop.f32.mrb[0].mxu0
        %v619 = vadd.f32 %v546, %v618
        %v620 = vpop.f32.mrb[0].mxu0
        %v621 = vadd.f32 %v548, %v620
        %v622 = vpop.f32.mrb[0].mxu0
        %v623 = vadd.f32 %v550, %v622
        %v624 = vpop.f32.mrb[0].mxu0
        %v625 = vadd.f32 %v552, %v624
        %626 = vmatprep.mubr.bf16.mxu0 0
        %627 = vmatmul.mubr.bf16.gmra.mrb[0].mxu0 %v252
        %v628 = vpop.f32.mrb[0].mxu0
        %v629 = vadd.f32 %v556, %v628
        %v630 = vpop.f32.mrb[0].mxu0
        %v631 = vadd.f32 %v558, %v630
        %v632 = vpop.f32.mrb[0].mxu0
        %v633 = vadd.f32 %v560, %v632
        %v634 = vpop.f32.mrb[0].mxu0
        %v635 = vadd.f32 %v562, %v634
        %636 = vmatprep.mubr.bf16.mxu0 0
        %637 = vmatmul.mubr.bf16.gmra.mrb[0].mxu0 %v255
        %v638 = vpop.f32.mrb[0].mxu0
        %v639 = vadd.f32 %v566, %v638
        %v640 = vpop.f32.mrb[0].mxu0
        %v641 = vadd.f32 %v568, %v640
        %v642 = vpop.f32.mrb[0].mxu0
        %v643 = vadd.f32 %v570, %v642
        %v644 = vpop.f32.mrb[0].mxu0
        %v645 = vadd.f32 %v572, %v644
        %646 = vmatprep.mubr.bf16.mxu0 0
        %647 = vmatmul.mubr.bf16.gmra.mrb[0].mxu0 %v258
        %v648 = vpop.f32.mrb[0].mxu0
        %v649 = vadd.f32 %v576, %v648
        %v650 = vpop.f32.mrb[0].mxu0
        %v651 = vadd.f32 %v578, %v650
        %v652 = vpop.f32.mrb[0].mxu0
        %v653 = vadd.f32 %v580, %v652
        %v654 = vpop.f32.mrb[0].mxu0
        %v655 = vadd.f32 %v582, %v654
        %656 = vdwg.mxu0
        %v657 = vpack.c.bf16 %v623, %v619
        %v658 = vpack.c.bf16 %v633, %v629
        %v659 = vpack.c.bf16 %v643, %v639
        %v660 = vpack.c.bf16 %v653, %v649
        %v661 = vpack.c.bf16 %v625, %v621
        %v662 = vpack.c.bf16 %v635, %v631
        %v663 = vpack.c.bf16 %v645, %v641
        %v664 = vpack.c.bf16 %v655, %v651
        %669 = vrot.lane.b32.xlu0 %v657, 64
        %v670 = vpop.permute.xlu0 %669
        %671 = vrot.lane.b32.xlu0 %v658, 64
        %v672 = vpop.permute.xlu0 %671
        %673 = vrot.lane.b32.xlu0 %v659, 64
        %v674 = vpop.permute.xlu0 %673
        %675 = vrot.lane.b32.xlu0 %v660, 64
        %v676 = vpop.permute.xlu0 %675
        %vm677 = vcmask 523264
        %v679 = vsel %vm677, %v657, 0
        %v682 = vsel %vm677, %v658, 0
        %v685 = vsel %vm677, %v659, 0
        %v688 = vsel %vm677, %v660, 0
        %v691 = vsel %vm677, %v670, 0
        %v694 = vsel %vm677, %v672, 0
        %v697 = vsel %vm677, %v674, 0
        %v700 = vsel %vm677, %v676, 0
        %702 = vmatprep.subr.bf16.mxu0 0
        %703 = vmatpush1.bf16.xpose.msra.mxu0 %v691
        %704 = vmatprep.subr.bf16.mxu0 0
        %705 = vmatpush1.bf16.xpose.msra.mxu0 %v694
        %706 = vmatprep.subr.bf16.mxu0 0
        %707 = vmatpush1.bf16.xpose.msra.mxu0 %v697
        %708 = vmatprep.subr.bf16.mxu0 0
        %709 = vmatpush1.bf16.xpose.msra.mxu0 %v700
        %710 = vmatprep.subr.bf16.mxu0 0
        %711 = vmatpush1.bf16.xpose.msra.mxu0 0
        %712 = vmatprep.subr.bf16.mxu0 0
        %713 = vmatpush1.bf16.xpose.msra.mxu0 0
        %714 = vmatprep.subr.bf16.mxu0 0
        %715 = vmatpush1.bf16.xpose.msra.mxu0 0
        %716 = vmatprep.subr.bf16.mxu0 0
        %717 = vmatpush1.bf16.xpose.msra.mxu0 0
        %718 = vmatprep.subr.bf16.mxu0 0
        %719 = vmatpush1.bf16.xpose.msra.mxu0 0
        %720 = vmatprep.subr.bf16.mxu0 0
        %721 = vmatpush1.bf16.xpose.msra.mxu0 0
        %722 = vmatprep.subr.bf16.mxu0 0
        %723 = vmatpush1.bf16.xpose.msra.mxu0 0
        %724 = vmatprep.subr.bf16.mxu0 0
        %725 = vmatpush1.bf16.xpose.msra.mxu0 0
        %726 = vmatprep.subr.bf16.mxu0 0
        %727 = vmatpush1.bf16.xpose.msra.mxu0 0
        %728 = vmatprep.subr.bf16.mxu0 0
        %729 = vmatpush1.bf16.xpose.msra.mxu0 0
        %730 = vmatprep.subr.bf16.mxu0 0
        %731 = vmatpush1.bf16.xpose.msra.mxu0 0
        %732 = vmatprep.subr.bf16.mxu0 0
        %733 = vmatpush1.bf16.xpose.msra.mxu0 0
        %734 = vmatprep.mubr.bf16.mxu0 0
        %735 = vmatmul.mubr.bf16.gmra.mrb[0].mxu0 %v679
        %v736 = vpop.f32.mrb[0].mxu0
        %v737 = vadd.f32 0.0, %v736
        %v738 = vpop.f32.mrb[0].mxu0
        %v739 = vpop.f32.mrb[0].mxu0
        %v740 = vadd.f32 0.0, %v739
        %v741 = vpop.f32.mrb[0].mxu0
        %742 = vmatprep.mubr.bf16.mxu0 0
        %743 = vmatmul.mubr.bf16.gmra.mrb[0].mxu0 %v682
        %v744 = vpop.f32.mrb[0].mxu0
        %v745 = vadd.f32 0.0, %v744
        %v746 = vpop.f32.mrb[0].mxu0
        %v747 = vpop.f32.mrb[0].mxu0
        %v748 = vadd.f32 0.0, %v747
        %v749 = vpop.f32.mrb[0].mxu0
        %750 = vmatprep.mubr.bf16.mxu0 0
        %751 = vmatmul.mubr.bf16.gmra.mrb[0].mxu0 %v685
        %v752 = vpop.f32.mrb[0].mxu0
        %v753 = vadd.f32 0.0, %v752
        %v754 = vpop.f32.mrb[0].mxu0
        %v755 = vpop.f32.mrb[0].mxu0
        %v756 = vadd.f32 0.0, %v755
        %v757 = vpop.f32.mrb[0].mxu0
        %758 = vmatprep.mubr.bf16.mxu0 0
        %759 = vmatmul.mubr.bf16.gmra.mrb[0].mxu0 %v688
        %v760 = vpop.f32.mrb[0].mxu0
        %v761 = vadd.f32 0.0, %v760
        %v762 = vpop.f32.mrb[0].mxu0
        %v763 = vpop.f32.mrb[0].mxu0
        %v764 = vadd.f32 0.0, %v763
        %v765 = vpop.f32.mrb[0].mxu0
        %766 = vdwg.mxu0
        %v767 = vlaneseq
        %v768 = vshrl.u32 %v767, 7
        %v769 = vadd.s32 %v768, 8
        %v770 = vadd.s32 %v768, 16
        %v771 = vadd.s32 %v768, 24
        %v772 = vadd.s32 %v768, 32
        %v773 = vadd.s32 %v768, 40
        %v774 = vadd.s32 %v768, 48
        %v775 = vadd.s32 %v768, 56
        %v776 = vlaneseq
        %v777 = vand.u32 %v776, 127
        %vm778 = vcmp.le.s32.totalorder %v777, %v768
        %vm779 = vcmp.le.s32.totalorder %v777, %v769
        %vm780 = vcmp.le.s32.totalorder %v777, %v770
        %vm781 = vcmp.le.s32.totalorder %v777, %v771
        %vm782 = vcmp.le.s32.totalorder %v777, %v772
        %vm783 = vcmp.le.s32.totalorder %v777, %v773
        %vm784 = vcmp.le.s32.totalorder %v777, %v774
        %vm785 = vcmp.le.s32.totalorder %v777, %v775
        %v786 = vsel %vm778, %v737, -inf
        %v787 = vsel %vm779, %v740, -inf
        %v788 = vsel %vm780, %v745, -inf
        %v789 = vsel %vm781, %v748, -inf
        %v790 = vsel %vm782, %v753, -inf
        %v791 = vsel %vm783, %v756, -inf
        %v792 = vsel %vm784, %v761, -inf
        %v793 = vsel %vm785, %v764, -inf
        %v794 = vsel %vm677, %v786, -inf
        %795 = vmax.xlane.f32.xlu0 %v794
        %v796 = vpop.xlane.xlu0 %795
        %v797 = vsel %vm677, %v787, -inf
        %798 = vmax.xlane.f32.xlu0 %v797
        %v799 = vpop.xlane.xlu0 %798
        %v800 = vsel %vm677, %v788, -inf
        %801 = vmax.xlane.f32.xlu0 %v800
        %v802 = vpop.xlane.xlu0 %801
        %v803 = vsel %vm677, %v789, -inf
        %804 = vmax.xlane.f32.xlu0 %v803
        %v805 = vpop.xlane.xlu0 %804
        %v806 = vsel %vm677, %v790, -inf
        %807 = vmax.xlane.f32.xlu0 %v806
        %v808 = vpop.xlane.xlu0 %807
        %v809 = vsel %vm677, %v791, -inf
        %810 = vmax.xlane.f32.xlu0 %v809
        %v811 = vpop.xlane.xlu0 %810
        %v812 = vsel %vm677, %v792, -inf
        %813 = vmax.xlane.f32.xlu0 %v812
        %v814 = vpop.xlane.xlu0 %813
        %v815 = vsel %vm677, %v793, -inf
        %816 = vmax.xlane.f32.xlu0 %v815
        %v817 = vpop.xlane.xlu0 %816
        %v818 = vsub.f32 %v786, %v796
        %v819 = vsub.f32 %v787, %v799
        %v820 = vsub.f32 %v788, %v802
        %v821 = vsub.f32 %v789, %v805
        %v822 = vsub.f32 %v790, %v808
        %v823 = vsub.f32 %v791, %v811
        %v824 = vsub.f32 %v792, %v814
        %v825 = vsub.f32 %v793, %v817
        %v826 = vmul.f32 %v818, 1.442695
        %v827 = vpow.pop %v826
        %v828 = vmul.f32 %v819, 1.442695
        %v829 = vpow.pop %v828
        %v830 = vmul.f32 %v820, 1.442695
        %v831 = vpow.pop %v830
        %v832 = vmul.f32 %v821, 1.442695
        %v833 = vpow.pop %v832
        %v834 = vmul.f32 %v822, 1.442695
        %v835 = vpow.pop %v834
        %v836 = vmul.f32 %v823, 1.442695
        %v837 = vpow.pop %v836
        %v838 = vmul.f32 %v824, 1.442695
        %v839 = vpow.pop %v838
        %v840 = vmul.f32 %v825, 1.442695
        %v841 = vpow.pop %v840
        %v842 = vsel %vm677, %v827, 0.0
        %843 = vadd.xlane.f32.xlu0 %v842
        %v844 = vpop.xlane.xlu0 %843
        %v845 = vsel %vm677, %v829, 0.0
        %846 = vadd.xlane.f32.xlu0 %v845
        %v847 = vpop.xlane.xlu0 %846
        %v848 = vsel %vm677, %v831, 0.0
        %849 = vadd.xlane.f32.xlu0 %v848
        %v850 = vpop.xlane.xlu0 %849
        %v851 = vsel %vm677, %v833, 0.0
        %852 = vadd.xlane.f32.xlu0 %v851
        %v853 = vpop.xlane.xlu0 %852
        %v854 = vsel %vm677, %v835, 0.0
        %855 = vadd.xlane.f32.xlu0 %v854
        %v856 = vpop.xlane.xlu0 %855
        %v857 = vsel %vm677, %v837, 0.0
        %858 = vadd.xlane.f32.xlu0 %v857
        %v859 = vpop.xlane.xlu0 %858
        %v860 = vsel %vm677, %v839, 0.0
        %861 = vadd.xlane.f32.xlu0 %v860
        %v862 = vpop.xlane.xlu0 %861
        %v863 = vsel %vm677, %v841, 0.0
        %864 = vadd.xlane.f32.xlu0 %v863
        %v865 = vpop.xlane.xlu0 %864
        %v866 = vrcp.pop %v844
        %v867 = vrcp.pop %v847
        %v868 = vrcp.pop %v850
        %v869 = vrcp.pop %v853
        %v870 = vrcp.pop %v856
        %v871 = vrcp.pop %v859
        %v872 = vrcp.pop %v862
        %v873 = vrcp.pop %v865
        %v874 = vmul.f32 %v827, %v866
        %v875 = vmul.f32 %v829, %v867
        %v876 = vmul.f32 %v831, %v868
        %v877 = vmul.f32 %v833, %v869
        %v878 = vmul.f32 %v835, %v870
        %v879 = vmul.f32 %v837, %v871
        %v880 = vmul.f32 %v839, %v872
        %v881 = vmul.f32 %v841, %v873
        %v882 = vpack.c.bf16 %v875, %v874
        %v883 = vpack.c.bf16 %v877, %v876
        %v884 = vpack.c.bf16 %v879, %v878
        %v885 = vpack.c.bf16 %v881, %v880
        %v887 = vsel %vm677, %v882, 0
        %v890 = vsel %vm677, %v883, 0
        %v893 = vsel %vm677, %v884, 0
        %v896 = vsel %vm677, %v885, 0
        %898 = vmatprep.subr.bf16.mxu0 0
        %899 = vmatpush1.bf16.msra.mxu0 %v661
        %900 = vmatprep.subr.bf16.mxu0 0
        %901 = vmatpush1.bf16.msra.mxu0 %v662
        %902 = vmatprep.subr.bf16.mxu0 0
        %903 = vmatpush1.bf16.msra.mxu0 %v663
        %904 = vmatprep.subr.bf16.mxu0 0
        %905 = vmatpush1.bf16.msra.mxu0 %v664
        %906 = vmatprep.subr.bf16.mxu0 0
        %907 = vmatpush1.bf16.msra.mxu0 0
        %908 = vmatprep.subr.bf16.mxu0 0
        %909 = vmatpush1.bf16.msra.mxu0 0
        %910 = vmatprep.subr.bf16.mxu0 0
        %911 = vmatpush1.bf16.msra.mxu0 0
        %912 = vmatprep.subr.bf16.mxu0 0
        %913 = vmatpush1.bf16.msra.mxu0 0
        %914 = vmatprep.subr.bf16.mxu0 0
        %915 = vmatpush1.bf16.msra.mxu0 0
        %916 = vmatprep.subr.bf16.mxu0 0
        %917 = vmatpush1.bf16.msra.mxu0 0
        %918 = vmatprep.subr.bf16.mxu0 0
        %919 = vmatpush1.bf16.msra.mxu0 0
        %920 = vmatprep.subr.bf16.mxu0 0
        %921 = vmatpush1.bf16.msra.mxu0 0
        %922 = vmatprep.subr.bf16.mxu0 0
        %923 = vmatpush1.bf16.msra.mxu0 0
        %924 = vmatprep.subr.bf16.mxu0 0
        %925 = vmatpush1.bf16.msra.mxu0 0
        %926 = vmatprep.subr.bf16.mxu0 0
        %927 = vmatpush1.bf16.msra.mxu0 0
        %928 = vmatprep.subr.bf16.mxu0 0
        %929 = vmatpush1.bf16.msra.mxu0 0
        %930 = vmatprep.mubr.bf16.mxu0 0
        %931 = vmatmul.mubr.bf16.gmra.mrb[0].mxu0 %v887
        %v932 = vpop.f32.mrb[0].mxu0
        %v933 = vadd.f32 0.0, %v932
        %v934 = vpop.f32.mrb[0].mxu0
        %v935 = vpop.f32.mrb[0].mxu0
        %v936 = vadd.f32 0.0, %v935
        %v937 = vpop.f32.mrb[0].mxu0
        %938 = vmatprep.mubr.bf16.mxu0 0
        %939 = vmatmul.mubr.bf16.gmra.mrb[0].mxu0 %v890
        %v940 = vpop.f32.mrb[0].mxu0
        %v941 = vadd.f32 0.0, %v940
        %v942 = vpop.f32.mrb[0].mxu0
        %v943 = vpop.f32.mrb[0].mxu0
        %v944 = vadd.f32 0.0, %v943
        %v945 = vpop.f32.mrb[0].mxu0
        %946 = vmatprep.mubr.bf16.mxu0 0
        %947 = vmatmul.mubr.bf16.gmra.mrb[0].mxu0 %v893
        %v948 = vpop.f32.mrb[0].mxu0
        %v949 = vadd.f32 0.0, %v948
        %v950 = vpop.f32.mrb[0].mxu0
        %v951 = vpop.f32.mrb[0].mxu0
        %v952 = vadd.f32 0.0, %v951
        %v953 = vpop.f32.mrb[0].mxu0
        %954 = vmatprep.mubr.bf16.mxu0 0
        %955 = vmatmul.mubr.bf16.gmra.mrb[0].mxu0 %v896
        %v956 = vpop.f32.mrb[0].mxu0
        %v957 = vadd.f32 0.0, %v956
        %v958 = vpop.f32.mrb[0].mxu0
        %v959 = vpop.f32.mrb[0].mxu0
        %v960 = vadd.f32 0.0, %v959
        %v961 = vpop.f32.mrb[0].mxu0
        %962 = vdwg.mxu0
        %963 = vst.msk [vmem:[%s136] sm:$0xff] %vm677, %v933
        %964 = vst.msk [vmem:[%s136 + $0x8] sm:$0xff] %vm677, %v936
        %965 = vst.msk [vmem:[%s136 + $0x10] sm:$0xff] %vm677, %v941
        %966 = vst.msk [vmem:[%s136 + $0x18] sm:$0xff] %vm677, %v944
        %967 = vst.msk [vmem:[%s136 + $0x20] sm:$0xff] %vm677, %v949
        %968 = vst.msk [vmem:[%s136 + $0x28] sm:$0xff] %vm677, %v952
        %969 = vst.msk [vmem:[%s136 + $0x30] sm:$0xff] %vm677, %v957
        %970 = vst.msk [vmem:[%s136 + $0x38] sm:$0xff] %vm677, %v960
        %s971 = sand.u32 %s71, 1
        %s972 = scalar_lea.sflag [#allocation3], %s971
        %s973 = sand.u32 %s71, 1
        %s974 = smul.addr %s973, 64
        %s975 = scalar_lea.vmem [#allocation2], %s974
        // Predicated region
        $region29: #{tpu_custom_call.1} parent=27 // pred_check
          %p976 = pneg %p81
        $region30: #{tpu_custom_call.1} parent=27 // pred_check_branch
          %978 = sbr.rel (%p976) target = $region32
        $region31: #{tpu_custom_call.1} parent=27 // pred_region
          %s980 = ssub.s32 1024, 1024
          %981 = vsyncadd %s972, %s980
          %s982 = smul.addr %s16, 8
          %s983 = smul.addr %s982, 128
          %s984 = scalar_lea.hbm %s2, %s983
          %s985 = sshll.u32 %s975, 4
          %s986 = int_to_ptr.vmem [resolvable:$true] %s985
          %991 = dma.vmem_to_hbm [thread:$0]  %s986, 1024, %s984, %s972, 128, 128, 8
        $region32: #{tpu_custom_call.1} parent=27 // pred_fallthru
          _
      $region28: #{tpu_custom_call.1} parent=5 // pred_fallthru
        _
      %p992 = scmp.le.s32.totalorder 2, %s11
      // Predicated region
      $region33: #{tpu_custom_call.1} parent=5 // pred_check
        %p993 = pneg %p992
      $region34: #{tpu_custom_call.1} parent=5 // pred_check_branch
        %995 = sbr.rel (%p993) target = $region36
      $region35: #{tpu_custom_call.1} parent=5 // pred_region
        %s996 = ssub.s32 %s11, 2
        // Predicated region
        $region37: #{tpu_custom_call.1} parent=35 // pred_check
          %p997 = pneg %p87
        $region38: #{tpu_custom_call.1} parent=35 // pred_check_branch
          %999 = sbr.rel (%p997) target = $region40
        $region39: #{tpu_custom_call.1} parent=35 // pred_region
          %s1000 = sand.u32 %s72, 1
          %s1001 = scalar_lea.sflag [#allocation3], %s1000
          %s1002 = sand.u32 %s72, 1
          %s1003 = smul.addr %s1002, 64
          %s1004 = scalar_lea.vmem [#allocation2], %s1003
          %1005 = dma.done %s1001, 1024
        $region40: #{tpu_custom_call.1} parent=35 // pred_fallthru
          _
      $region36: #{tpu_custom_call.1} parent=5 // pred_fallthru
        _
    $region6: #{tpu_custom_call.1} parent=1 // loop_footer
      %s15 = sadd.s32 1, %s11
    $region7: #{tpu_custom_call.1} parent=1 // loop_footer_branch
      %10 = sbr.rel target = $region3
    $region8: #{tpu_custom_call.1} parent=1 // loop_exit
      _
    %1006 = vsyncpa [#allocation3], 1
    %s1007 = scalar_lea.sflag [#allocation3], 1
    %1008 = vsyncpa %s1007, 1

</llo_original>
